<compile_context>
chip_gen: v5e
topology: v5e:2x2
jax: 0.10.0
libtpu: 0.0.40
codegen_flags: <defaults>
</compile_context>

<pallas_src>
import functools

import jax
import jax.numpy as jnp
from jax.experimental import pallas as pl
from jax.experimental.pallas import tpu as pltpu


def _round_up(x, m):
    return ((x + m - 1) // m) * m


def _sublane_multiple(dtype):
    # Minimum sublane tile: 8 for 4-byte, 16 for 2-byte, 32 for 1-byte dtypes.
    itemsize = jnp.dtype(dtype).itemsize
    return max(8, 32 // itemsize)


def prepare_encoder_params(weight, bias, dtype=jnp.float32):
    """One-time parameter preparation (hoisted out of the per-call forward).

    weight : [S, E]  (PyTorch nn.Linear layout)
    bias   : [S]
    returns: (w_t [E, S], b_row [1, S]) — pass these to encoder_forward.
    """
    w_t = jnp.asarray(weight, dtype=dtype).T + jnp.zeros((), dtype=dtype)  # materialize once
    b_row = jnp.asarray(bias, dtype=dtype).reshape(1, -1)
    return w_t, b_row


def _linear_kernel(x_ref, w_ref, b_ref, o_ref):
    # x_ref: (tm, E)   w_ref: (E, S)   b_ref: (1, S)   o_ref: (tm, S)
    acc = jnp.dot(x_ref[...], w_ref[...], preferred_element_type=jnp.float32)
    o_ref[...] = (acc + b_ref[...].astype(jnp.float32)).astype(o_ref.dtype)


@functools.partial(jax.jit, static_argnames=("max_tm",))
def encoder_forward(attn_out, w_t, b_row, *, max_tm=8192):
    """skill = attn_out @ weight.T + bias  (same semantics as F.linear).

    attn_out : [..., E]
    w_t      : [E, S]   (pre-transposed weight from prepare_encoder_params)
    b_row    : [1, S]
    returns  : [..., S]
    """
    orig_shape = attn_out.shape
    E = orig_shape[-1]
    S = w_t.shape[-1]
    x = attn_out.reshape(-1, E)
    N = x.shape[0]
    dtype = x.dtype

    sub = _sublane_multiple(dtype)
    itemsize = jnp.dtype(dtype).itemsize

    # Cap the row tile so double-buffered input+output tiles stay well inside
    # v5e's 16 MiB default scoped VMEM (v6e/v7x have more headroom).
    bytes_per_row = 2 * (E + S) * itemsize
    vmem_budget = 8 * 1024 * 1024
    tm_cap = max(sub, (vmem_budget // bytes_per_row) // sub * sub)
    tm_cap = min(tm_cap, max_tm)

    # >= 2 parallel grid steps for large N so v7x megacore uses both TCs;
    # tm sized so row padding is at most one sublane group per step.
    min_steps = 2 if N >= 4096 else 1
    steps = max(pl.cdiv(N, tm_cap), min_steps)
    tm = min(_round_up(pl.cdiv(N, steps), sub), tm_cap)
    num_steps = pl.cdiv(N, tm)
    N_pad = num_steps * tm

    if N_pad != N:
        x = jnp.zeros((N_pad, E), dtype=dtype).at[:N, :].set(x)

    out = pl.pallas_call(
        _linear_kernel,
        out_shape=jax.ShapeDtypeStruct((N_pad, S), dtype),
        grid_spec=pltpu.PrefetchScalarGridSpec(
            num_scalar_prefetch=0,
            grid=(num_steps,),
            in_specs=[
                pl.BlockSpec((tm, E), lambda i: (i, 0)),   # row tiles of attn_out
                pl.BlockSpec((E, S), lambda i: (0, 0)),    # weight resident in VMEM
                pl.BlockSpec((1, S), lambda i: (0, 0)),    # bias resident in VMEM
            ],
            out_specs=pl.BlockSpec((tm, S), lambda i: (i, 0)),  # unpadded [N_pad, S]
        ),
        compiler_params=pltpu.CompilerParams(
            dimension_semantics=("parallel",),
        ),
    )(x, w_t, b_row)

    if N_pad != N:
        out = out[:N]
    return out.reshape(*orig_shape[:-1], S)


if __name__ == "__main__":
    # Shapes consistent with the module:
    #   entity_embed_dim = 32, skill_dim = 8, N = batch * n_agents = 2 * 8 = 16.
    entity_embed_dim = 32
    skill_dim = 8
    batch, n_agents = 2, 8
    N = batch * n_agents

    key = jax.random.PRNGKey(0)
    k_x, k_w, k_b = jax.random.split(key, 3)

    attn_out = jax.random.normal(k_x, (N, entity_embed_dim), dtype=jnp.float32)

    # nn.Linear parameters: weight [skill_dim, entity_embed_dim], bias [skill_dim].
    weight = jax.random.normal(k_w, (skill_dim, entity_embed_dim), dtype=jnp.float32) * 0.1
    bias = jax.random.normal(k_b, (skill_dim,), dtype=jnp.float32) * 0.1

    # One-time parameter prep (hoisted out of the jitted per-call forward).
    w_t, b_row = prepare_encoder_params(weight, bias)

    skill = encoder_forward(attn_out, w_t, b_row)
    skill = jax.block_until_ready(skill)

    ref = attn_out @ weight.T + bias
    assert skill.shape == (N, skill_dim)
    assert jnp.allclose(skill, ref, atol=1e-5, rtol=1e-5)

    # Also exercise the multi-step (large-N / megacore) path for correctness.
    N_big = 4100
    x_big = jax.random.normal(k_x, (N_big, entity_embed_dim), dtype=jnp.float32)
    out_big = jax.block_until_ready(encoder_forward(x_big, w_t, b_row))
    ref_big = x_big @ weight.T + bias
    assert out_big.shape == (N_big, skill_dim)
    assert jnp.allclose(out_big, ref_big, atol=1e-4, rtol=1e-4)

    print("KERNEL_OK")
</pallas_src>

<mosaic_0001>
module attributes {stable_mosaic.version = 11 : i64} {
  func.func @_linear_kernel(%arg0: i32, %arg1: memref<16x32xf32, #tpu.memory_space<vmem>>, %arg2: memref<32x8xf32, #tpu.memory_space<vmem>>, %arg3: memref<1x8xf32, #tpu.memory_space<vmem>>, %arg4: memref<16x8xf32, #tpu.memory_space<vmem>>) attributes {dimension_semantics = [#tpu.dimension_semantics<parallel>], iteration_bounds = array<i64: 1>, scalar_prefetch = 0 : i64, scratch_operands = 0 : i64, tpu.core_type = #tpu.core_type<tc>, window_params = [{transform_indices = @transform_0, window_bounds = array<i64: 16, 32>}, {pipeline_mode = #tpu.pipeline_mode<synchronous>, transform_indices = @transform_1, window_bounds = array<i64: 32, 8>}, {pipeline_mode = #tpu.pipeline_mode<synchronous>, transform_indices = @transform_2, window_bounds = array<i64: 1, 8>}, {transform_indices = @transform_3, window_bounds = array<i64: 16, 8>}]} {
    %c0 = arith.constant 0 : index
    %c0_0 = arith.constant 0 : index
    %0 = vector.load %arg1[%c0, %c0_0] : memref<16x32xf32, #tpu.memory_space<vmem>>, vector<16x32xf32>
    %c0_1 = arith.constant 0 : index
    %c0_2 = arith.constant 0 : index
    %1 = vector.load %arg2[%c0_1, %c0_2] : memref<32x8xf32, #tpu.memory_space<vmem>>, vector<32x8xf32>
    %cst = arith.constant dense<0.000000e+00> : vector<16x8xf32>
    %2 = tpu.matmul %0, %1, %cst {dimension_numbers = #tpu.dot_dimension_numbers<[1], [0], [0], [1], [0, 0, 1, 1], [], []>} : vector<16x32xf32>, vector<32x8xf32>, vector<16x8xf32> -> vector<16x8xf32>
    %c0_3 = arith.constant 0 : index
    %c0_4 = arith.constant 0 : index
    %3 = vector.load %arg3[%c0_3, %c0_4] : memref<1x8xf32, #tpu.memory_space<vmem>>, vector<1x8xf32>
    %4 = vector.broadcast %3 : vector<1x8xf32> to vector<16x8xf32>
    %5 = arith.addf %2, %4 : vector<16x8xf32>
    %c0_5 = arith.constant 0 : index
    %c0_6 = arith.constant 0 : index
    %6 = vector.load %arg4[%c0_5, %c0_6] : memref<16x8xf32, #tpu.memory_space<vmem>>, vector<16x8xf32>
    tpu.vector_store %arg4[%c0_5, %c0_6], %5 {strides = array<i32>} : memref<16x8xf32, #tpu.memory_space<vmem>>, vector<16x8xf32>,
    return
  }
  func.func @transform_0(%arg0: i32) -> (i32, i32) {
    %c0_i32 = arith.constant 0 : i32
    %c0_i32_0 = arith.constant 0 : i32
    return %arg0, %c0_i32 : i32, i32
  }
  func.func @transform_1(%arg0: i32) -> (i32, i32) {
    %c0_i32 = arith.constant 0 : i32
    %c0_i32_0 = arith.constant 0 : i32
    %c0_i32_1 = arith.constant 0 : i32
    return %c0_i32, %c0_i32_0 : i32, i32
  }
  func.func @transform_2(%arg0: i32) -> (i32, i32) {
    %c0_i32 = arith.constant 0 : i32
    %c0_i32_0 = arith.constant 0 : i32
    %c0_i32_1 = arith.constant 0 : i32
    return %c0_i32, %c0_i32_0 : i32, i32
  }
  func.func @transform_3(%arg0: i32) -> (i32, i32) {
    %c0_i32 = arith.constant 0 : i32
    %c0_i32_0 = arith.constant 0 : i32
    return %arg0, %c0_i32 : i32, i32
  }
}

</mosaic_0001>

<llo_original>
// kernel: encoder_forward.1
$region0: #{encoder_forward.1}
  #allocation0 [shape = 'u32[]', space=smem, size = 0x4, offset = 0x4, fixed_abs, tag = 'smem constant byte address 0x4 - core index']
  #allocation1 [shape = 'u32[72,128]{1,0:T(1,128)}', space=vmem, size = 0x9000, scoped, tag = 'internal scratch']
  %s0 = inlined_call_operand.vmem [shape: f32[16,32], index: 0, kind: input, shape index: {}]
  %s1 = inlined_call_operand.vmem [shape: f32[32,8], index: 1, kind: input, shape index: {}]
  %s2 = inlined_call_operand.vmem [shape: f32[1,8], index: 2, kind: input, shape index: {}]
  %s3 = inlined_call_operand.vmem [shape: f32[16,8], index: 3, kind: output, shape index: {}]
  %s4 = sld [smem:[#allocation0]]
  $region22: #{encoder_forward.1} parent=0
    _
  %s6 = ssub.s32 1, %s4
  %s7 = scalar_select 0, %s6, %s4
  // Predicated region
  $region2: #{encoder_forward.1} parent=0 // pred_check
    _
  $region3: #{encoder_forward.1} parent=0 // pred_check_branch
    %9 = sbr.rel (0) target = $region5
  $region4: #{encoder_forward.1} parent=0 // pred_region
    _
  $region5: #{encoder_forward.1} parent=0 // pred_fallthru
    _
  // Predicated region
  $region6: #{encoder_forward.1} parent=0 // pred_check
    _
  $region7: #{encoder_forward.1} parent=0 // pred_check_branch
    %11 = sbr.rel (0) target = $region9
  $region8: #{encoder_forward.1} parent=0 // pred_region
    _
  $region9: #{encoder_forward.1} parent=0 // pred_fallthru
    _
  // Predicated region
  $region10: #{encoder_forward.1} parent=0 // pred_check
    _
  $region11: #{encoder_forward.1} parent=0 // pred_check_branch
    %13 = sbr.rel (0) target = $region13
  $region12: #{encoder_forward.1} parent=0 // pred_region
    _
  $region13: #{encoder_forward.1} parent=0 // pred_fallthru
    _
  %v14 = vld [vmem:[%s0] sm:$0xff]
  %v15 = vld [vmem:[%s0 + $0x8] sm:$0xff]
  %v16 = vld [vmem:[%s1] sm:$0xff]
  %v17 = vld [vmem:[%s1 + $0x8] sm:$0xff]
  %v18 = vld [vmem:[%s1 + $0x10] sm:$0xff]
  %v19 = vld [vmem:[%s1 + $0x18] sm:$0xff]
  %v20 = vld [vmem:[%s2] sm:$0x1]
  %v22 = vperm.slane %v20, 0
  %vm24 = vcmask 261120
  %v26 = vsel %vm24, %v14, 0
  %v29 = vsel %vm24, %v15, 0
  %31 = vmatpush.msra.mxu0 0.0
  %32 = vmatpush.msra.mxu0 0.0
  %33 = vmatpush.msra.mxu0 0.0
  %34 = vmatpush.msra.mxu0 0.0
  %35 = vmatpush.msra.mxu0 0.0
  %36 = vmatpush.msra.mxu0 0.0
  %37 = vmatpush.msra.mxu0 0.0
  %38 = vmatpush.msra.mxu0 0.0
  %39 = vmatpush.msra.mxu0 0.0
  %40 = vmatpush.msra.mxu0 0.0
  %41 = vmatpush.msra.mxu0 0.0
  %42 = vmatpush.msra.mxu0 0.0
  %43 = vmatpush.msra.mxu0 %v19
  %44 = vmatpush.msra.mxu0 %v18
  %45 = vmatpush.msra.mxu0 %v17
  %46 = vmatpush.msra.mxu0 %v16
  %47 = vmatmul.f32.gmra.mxu0 %v26
  %v48 = vpop.f32.mrf.mxu0
  %v49 = vadd.f32 %v22, %v48
  %50 = vmatmul.f32.gmra.mxu0 %v29
  %v51 = vpop.f32.mrf.mxu0
  %v52 = vadd.f32 %v22, %v51
  %53 = vdwg.mxu0
  %vm54 = vcmask 64512
  %55 = vst.msk [vmem:[%s3] sm:$0xff] %vm54, %v49
  %56 = vst.msk [vmem:[%s3 + $0x8] sm:$0xff] %vm54, %v52
  // Predicated region
  $region14: #{encoder_forward.1} parent=0 // pred_check
    _
  $region15: #{encoder_forward.1} parent=0 // pred_check_branch
    %58 = sbr.rel (0) target = $region17
  $region16: #{encoder_forward.1} parent=0 // pred_region
    _
  $region17: #{encoder_forward.1} parent=0 // pred_fallthru
    _
  // Predicated region
  $region18: #{encoder_forward.1} parent=0 // pred_check
    _
  $region19: #{encoder_forward.1} parent=0 // pred_check_branch
    %60 = sbr.rel (0) target = $region21
  $region20: #{encoder_forward.1} parent=0 // pred_region
    _
  $region21: #{encoder_forward.1} parent=0 // pred_fallthru
    _

</llo_original>
